<compile_context>
chip_gen: v7x
topology: tpu7x:2x2x1
jax: 0.10.0
libtpu: 0.0.40
codegen_flags: <defaults>
</compile_context>

<pallas_src>
import functools

import jax
import jax.numpy as jnp
from jax.experimental import pallas as pl
from jax.experimental.pallas import tpu as pltpu


def _ce_sum_kernel(x_ref, t_ref, acc_ref, *, ignore_index: int, hw: int,
                   tile_hw: int):
    """One grid step: (1, C, TILE_HW) logits block, (1, 1, TILE_HW) targets.

    x_ref   : (1, C, TILE_HW)  logits (any float dtype)
    t_ref   : (1, 1, TILE_HW)  int32 targets
    acc_ref : (1, 1, TILE_HW)  f32 running per-lane loss accumulator (per batch)
    """
    i = pl.program_id(1)

    # Zero this batch's accumulator on the first spatial tile.
    @pl.when(i == 0)
    def _():
        acc_ref[...] = jnp.zeros_like(acc_ref)

    x = x_ref[0].astype(jnp.float32)          # (C, TILE_HW)
    t = t_ref[0]                              # (1, TILE_HW) int32

    # Numerically stable log-sum-exp over the class (sublane) axis.
    m = jnp.max(x, axis=0, keepdims=True)                                 # (1, T)
    lse = m + jnp.log(jnp.sum(jnp.exp(x - m), axis=0, keepdims=True))     # (1, T)

    # Gather x[target, col] via a one-hot mask over the class axis.
    cls = jax.lax.broadcasted_iota(jnp.int32, x.shape, 0)                 # (C, T)
    picked = jnp.sum(jnp.where(cls == t, x, 0.0), axis=0, keepdims=True)  # (1, T)

    # Validity: column inside the real spatial extent AND not ignore_index.
    # (Out-of-bounds tail columns hold garbage logits/targets; the select
    #  masks them -- NaN/Inf in the unselected branch does not propagate.)
    col = jax.lax.broadcasted_iota(jnp.int32, t.shape, 1) + i * tile_hw   # (1, T)
    valid = (col < hw) & (t != ignore_index)

    loss = jnp.where(valid, lse - picked, 0.0)                            # (1, T)

    # Pure element-wise (VPU) accumulation; final reduce happens in wrapper.
    acc_ref[...] += loss[None]


def _pick_tile_hw(c: int, hw: int, dtype_bytes: int) -> int:
    # ~2 MiB logits block: big enough to sit near HBM roofline, small enough
    # that double-buffered inputs fit even v5e's 16 MiB scoped-VMEM default
    # and v7x's 64 MiB physical VMEM.
    target_bytes = 2 * 1024 * 1024
    tile = target_bytes // max(c * dtype_bytes, 1)
    tile = max(128, (tile // 128) * 128)
    tile = min(tile, 16384)                       # cap lane extent
    tile = min(tile, pl.cdiv(hw, 128) * 128)      # never exceed spatial extent
    return int(tile)


def cross_entropy_loss_2d(logits_nchw, targets_nhw, *, ignore_index=-1,
                          tile_hw=None):
    """Equivalent of CrossEntropyLoss2d().forward(inputs, targets).

    Returns a float32 scalar: sum over valid pixels of -log_softmax(x)[target].
    """
    N, C, H, W = logits_nchw.shape
    HW = H * W

    # Free views: no transpose, no pad, no dtype upcast in HBM.
    x = logits_nchw.reshape(N, C, HW)
    t = targets_nhw.reshape(N, 1, HW).astype(jnp.int32)

    if tile_hw is None:
        tile_hw = _pick_tile_hw(C, HW, jnp.dtype(x.dtype).itemsize)
    tile_hw = int(tile_hw)

    num_tiles = pl.cdiv(HW, tile_hw)
    grid = (N, num_tiles)

    partial = pl.pallas_call(
        functools.partial(_ce_sum_kernel, ignore_index=ignore_index,
                          hw=HW, tile_hw=tile_hw),
        out_shape=jax.ShapeDtypeStruct((N, 1, tile_hw), jnp.float32),
        grid_spec=pltpu.PrefetchScalarGridSpec(
            num_scalar_prefetch=0,
            grid=grid,
            in_specs=[
                pl.BlockSpec((1, C, tile_hw), lambda n, i: (n, 0, i)),
                pl.BlockSpec((1, 1, tile_hw), lambda n, i: (n, 0, i)),
            ],
            out_specs=pl.BlockSpec((1, 1, tile_hw), lambda n, i: (n, 0, 0)),
        ),
        compiler_params=pltpu.CompilerParams(
            dimension_semantics=("parallel", "arbitrary")),
    )(x, t)

    # Tiny (N, 1, TILE_HW) slab; collapse to the scalar outside the kernel.
    return jnp.sum(partial)


def _reference(logits_nchw, targets_nhw, ignore_index=-1):
    logp = jax.nn.log_softmax(logits_nchw.astype(jnp.float32), axis=1)
    t = targets_nhw.astype(jnp.int32)
    safe_t = jnp.where(t == ignore_index, 0, t)
    picked = jnp.take_along_axis(logp, safe_t[:, None, :, :], axis=1)[:, 0]
    valid = (t != ignore_index).astype(jnp.float32)
    return -jnp.sum(picked * valid)


if __name__ == "__main__":
    key = jax.random.PRNGKey(0)
    k_logits, k_tgt, k_ign = jax.random.split(key, 3)

    N, C, H, W = 2, 4, 16, 16
    logits = jax.random.normal(k_logits, (N, C, H, W), dtype=jnp.float32)
    targets = jax.random.randint(k_tgt, (N, H, W), 0, C, dtype=jnp.int32)
    # Sprinkle some ignore_index (-1) pixels.
    ignore_mask = jax.random.bernoulli(k_ign, 0.1, (N, H, W))
    targets = jnp.where(ignore_mask, -1, targets)

    loss = cross_entropy_loss_2d(logits, targets, ignore_index=-1)
    loss = jax.block_until_ready(loss)

    ref = jax.block_until_ready(_reference(logits, targets, ignore_index=-1))
    assert jnp.allclose(loss, ref, rtol=1e-5, atol=1e-4), (loss, ref)

    print("KERNEL_OK")
</pallas_src>

<mosaic_0001>
module attributes {stable_mosaic.version = 11 : i64} {
  func.func @_ce_sum_kernel(%arg0: i32, %arg1: i32, %arg2: memref<1x4x256xf32, #tpu.memory_space<vmem>>, %arg3: memref<1x1x256xi32, #tpu.memory_space<vmem>>, %arg4: memref<1x1x256xf32, #tpu.memory_space<vmem>>) attributes {dimension_semantics = [#tpu.dimension_semantics<parallel>, #tpu.dimension_semantics<arbitrary>], iteration_bounds = array<i64: 2, 1>, scalar_prefetch = 0 : i64, scratch_operands = 0 : i64, tpu.core_type = #tpu.core_type<tc>, window_params = [{transform_indices = @transform_0, window_bounds = array<i64: 1, 4, 256>}, {transform_indices = @transform_1, window_bounds = array<i64: 1, 1, 256>}, {transform_indices = @transform_2, window_bounds = array<i64: 1, 1, 256>}]} {
    %c0_i32 = arith.constant 0 : i32
    %0 = arith.cmpi eq, %arg1, %c0_i32 : i32
    %1 = arith.extui %0 : i1 to i32
    %c0_i32_0 = arith.constant 0 : i32
    %2 = arith.cmpi ne, %1, %c0_i32_0 : i32
    scf.if %2 {
      %cst_17 = arith.constant 0.000000e+00 : f32
      %39 = vector.broadcast %cst_17 : f32 to vector<1x1x256xf32>
      %c0_18 = arith.constant 0 : index
      %c0_19 = arith.constant 0 : index
      %c0_20 = arith.constant 0 : index
      %40 = vector.load %arg4[%c0_18, %c0_19, %c0_20] : memref<1x1x256xf32, #tpu.memory_space<vmem>>, vector<1x1x256xf32>
      tpu.vector_store %arg4[%c0_18, %c0_19, %c0_20], %39 {strides = array<i32>} : memref<1x1x256xf32, #tpu.memory_space<vmem>>, vector<1x1x256xf32>,
    } else {
    }
    %c0 = arith.constant 0 : index
    %c0_1 = arith.constant 0 : index
    %c0_2 = arith.constant 0 : index
    %3 = vector.load %arg2[%c0, %c0_1, %c0_2] : memref<1x4x256xf32, #tpu.memory_space<vmem>>, vector<1x4x256xf32>
    %4 = vector.shape_cast %3 : vector<1x4x256xf32> to vector<4x256xf32>
    %c0_3 = arith.constant 0 : index
    %c0_4 = arith.constant 0 : index
    %c0_5 = arith.constant 0 : index
    %5 = vector.load %arg3[%c0_3, %c0_4, %c0_5] : memref<1x1x256xi32, #tpu.memory_space<vmem>>, vector<1x1x256xi32>
    %6 = vector.shape_cast %5 : vector<1x1x256xi32> to vector<1x256xi32>
    %cst = arith.constant dense<0xFF800000> : vector<256xf32>
    %7 = vector.multi_reduction <maximumf>, %4, %cst [0] : vector<4x256xf32> to vector<256xf32>
    %8 = vector.shape_cast %7 : vector<256xf32> to vector<1x256xf32>
    %9 = vector.broadcast %8 : vector<1x256xf32> to vector<4x256xf32>
    %10 = arith.subf %4, %9 : vector<4x256xf32>
    %11 = math.exp %10 : vector<4x256xf32>
    %cst_6 = arith.constant dense<0.000000e+00> : vector<256xf32>
    %12 = vector.multi_reduction <add>, %11, %cst_6 [0] : vector<4x256xf32> to vector<256xf32>
    %13 = vector.shape_cast %12 : vector<256xf32> to vector<1x256xf32>
    %14 = math.log %13 : vector<1x256xf32>
    %15 = arith.addf %8, %14 : vector<1x256xf32>
    %16 = tpu.iota {dimensions = array<i32: 0>} : vector<4x256xi32>
    %17 = vector.broadcast %6 : vector<1x256xi32> to vector<4x256xi32>
    %18 = arith.cmpi eq, %16, %17 : vector<4x256xi32>
    %cst_7 = arith.constant 0.000000e+00 : f32
    %19 = vector.broadcast %cst_7 : f32 to vector<4x256xf32>
    %20 = arith.select %18, %4, %19 : vector<4x256xi1>, vector<4x256xf32>
    %cst_8 = arith.constant dense<0.000000e+00> : vector<256xf32>
    %21 = vector.multi_reduction <add>, %20, %cst_8 [0] : vector<4x256xf32> to vector<256xf32>
    %22 = vector.shape_cast %21 : vector<256xf32> to vector<1x256xf32>
    %23 = tpu.iota {dimensions = array<i32: 1>} : vector<1x256xi32>
    %c256_i32 = arith.constant 256 : i32
    %24 = arith.muli %arg1, %c256_i32 : i32
    %25 = vector.broadcast %24 : i32 to vector<1x256xi32>
    %26 = arith.addi %23, %25 : vector<1x256xi32>
    %c256_i32_9 = arith.constant 256 : i32
    %27 = vector.broadcast %c256_i32_9 : i32 to vector<1x256xi32>
    %28 = arith.cmpi slt, %26, %27 : vector<1x256xi32>
    %c-1_i32 = arith.constant -1 : i32
    %29 = vector.broadcast %c-1_i32 : i32 to vector<1x256xi32>
    %30 = arith.cmpi ne, %6, %29 : vector<1x256xi32>
    %31 = arith.andi %28, %30 : vector<1x256xi1>
    %32 = arith.subf %15, %22 : vector<1x256xf32>
    %cst_10 = arith.constant 0.000000e+00 : f32
    %33 = vector.broadcast %cst_10 : f32 to vector<1x256xf32>
    %34 = arith.select %31, %32, %33 : vector<1x256xi1>, vector<1x256xf32>
    %c0_11 = arith.constant 0 : index
    %c0_12 = arith.constant 0 : index
    %c0_13 = arith.constant 0 : index
    %35 = vector.load %arg4[%c0_11, %c0_12, %c0_13] : memref<1x1x256xf32, #tpu.memory_space<vmem>>, vector<1x1x256xf32>
    %36 = vector.shape_cast %34 : vector<1x256xf32> to vector<1x1x256xf32>
    %37 = arith.addf %35, %36 : vector<1x1x256xf32>
    %c0_14 = arith.constant 0 : index
    %c0_15 = arith.constant 0 : index
    %c0_16 = arith.constant 0 : index
    %38 = vector.load %arg4[%c0_14, %c0_15, %c0_16] : memref<1x1x256xf32, #tpu.memory_space<vmem>>, vector<1x1x256xf32>
    tpu.vector_store %arg4[%c0_14, %c0_15, %c0_16], %37 {strides = array<i32>} : memref<1x1x256xf32, #tpu.memory_space<vmem>>, vector<1x1x256xf32>,
    return
  }
  func.func @transform_0(%arg0: i32, %arg1: i32) -> (i32, i32, i32) {
    %c0_i32 = arith.constant 0 : i32
    %c0_i32_0 = arith.constant 0 : i32
    return %arg0, %c0_i32, %arg1 : i32, i32, i32
  }
  func.func @transform_1(%arg0: i32, %arg1: i32) -> (i32, i32, i32) {
    %c0_i32 = arith.constant 0 : i32
    %c0_i32_0 = arith.constant 0 : i32
    return %arg0, %c0_i32, %arg1 : i32, i32, i32
  }
  func.func @transform_2(%arg0: i32, %arg1: i32) -> (i32, i32, i32) {
    %c0_i32 = arith.constant 0 : i32
    %c0_i32_0 = arith.constant 0 : i32
    %c0_i32_1 = arith.constant 0 : i32
    return %arg0, %c0_i32, %c0_i32_0 : i32, i32, i32
  }
}

</mosaic_0001>

<llo_original>
// kernel: tpu_custom_call.1
$region0: #{tpu_custom_call.1}
  #allocation0 [shape = 'u32[]', space=smem, size = 0x4, offset = 0x4, fixed_abs, tag = 'smem constant byte address 0x4 - core index']
  #allocation1 [shape = 'u32[144,128]{1,0:T(1,128)}', space=vmem, size = 0x12000, scoped, tag = 'internal scratch']
  %s0 = inlined_call_operand.hbm [shape: f32[2,4,256], index: 0, kind: input, shape index: {}]
  %s1 = inlined_call_operand.hbm [shape: s32[2,1,256], index: 1, kind: input, shape index: {}]
  %s2 = inlined_call_operand.hbm [shape: f32[2,1,256], index: 2, kind: output, shape index: {}]
  %s3 = sld [smem:[#allocation0]]
  $region53: #{tpu_custom_call.1} parent=0
    _
  %s5 = ssub.s32 1, %s3
  %s6 = scalar_select 0, %s5, %s3
  $region1: #{tpu_custom_call.1} parent=0
    #allocation2 [shape = 'u8[8192]{0}', space=vmem, size = 0x2000, scoped, tag = 'input window, operand 0']
    #allocation3 [shape = 's32[2]{0}', space=sflag, size = 0x8, scoped, tag = 'scoped memory for tpu_custom_call.1']
    #allocation4 [shape = 's32[2]{0}', space=sflag, size = 0x8, scoped, tag = 'scoped memory for tpu_custom_call.1']
    #allocation5 [shape = 'u8[2048]{0}', space=vmem, size = 0x800, scoped, tag = 'input window, operand 1']
    #allocation6 [shape = 's32[2]{0}', space=sflag, size = 0x8, scoped, tag = 'scoped memory for tpu_custom_call.1']
    #allocation7 [shape = 'u8[2048]{0}', space=vmem, size = 0x800, scoped, tag = 'output window, operand 0']
    %7 = vsyncpa [#allocation3], 0
    %s8 = scalar_lea.sflag [#allocation3], 1
    %9 = vsyncpa %s8, 0
    %10 = vsyncpa [#allocation6], 0
    %s11 = scalar_lea.sflag [#allocation6], 1
    %12 = vsyncpa %s11, 0
    %13 = vsyncpa [#allocation4], 0
    %s14 = scalar_lea.sflag [#allocation4], 1
    %15 = vsyncpa %s14, 0
    loop: start=0, step=1, limit=4
    $region2: #{tpu_custom_call.1} parent=1 // loop_pre_header
      _
    $region3: #{tpu_custom_call.1} parent=1 // loop_header
      %s17 = sphi 0, %s21
      %p18 = scmp.ge.s32.totalorder %s17, 4
      %s24 = sphi 0, %s36
      %s25 = sphi 0, %s32
      %s26 = sphi 0, %s24
      %s27 = sphi 0, %s25
      %s28 = sphi 0, %s26
      %s29 = sphi 0, %s27
      %s41 = sphi 0, %s43
      %s44 = sphi 0, %s41
      %s45 = sphi 0, %s44
      %s61 = sphi 0, %s45
      %s69 = sphi 0, %s71
      %s72 = sphi 0, %s69
      %s73 = sphi 0, %s72
      %s89 = sphi 0, %s73
      %s95 = sphi 0, %s97
      %s98 = sphi 0, %s95
      %s99 = sphi 0, %s98
      %s115 = sphi 0, %s99
    $region4: #{tpu_custom_call.1} parent=1 // loop_header_branch
      %20 = sbr.rel (%p18) target = $region8
    $region5: #{tpu_custom_call.1} parent=1 // loop_body
      %s22 = ssub.s32 %s17, 1
      %s23 = ssub.s32 %s17, 2
      %s30 = sadd.s32 1, %s25
      %p31 = scmp.ge.s32.totalorder %s30, 1
      %s32 = scalar_select %p31, 0, %s30
      %s33 = sadd.s32 1, %s24
      %s34 = scalar_select %p31, %s33, %s24
      %p35 = scmp.ge.s32.totalorder %s34, 2
      %s36 = scalar_select %p35, 0, %s34
      %s37 = ssub.s32 %s24, %s36
      %s38 = ssub.s32 %s25, %s32
      %s39 = sor.u32 %s37, %s38
      %p40 = scmp.eq.s32.totalorder %s39, 0
      %s42 = sadd.s32 %s41, 1
      %s43 = scalar_select %p40, %s41, %s42
      %p46 = pneg %p40
      %p47 = scmp.eq.s32.totalorder %s17, 1
      %p48 = por %p46, %p47
      %p49 = scmp.ne.s32.totalorder %s41, %s44
      %p50 = scmp.eq.s32.totalorder %s17, 0
      %p51 = por %p49, %p50
      %p52 = scmp.ne.s32.totalorder %s41, %s44
      %p53 = scmp.eq.s32.totalorder %s22, 1
      %p54 = por %p52, %p53
      %p55 = scmp.ne.s32.totalorder %s44, %s45
      %p56 = scmp.eq.s32.totalorder %s22, 0
      %p57 = por %p55, %p56
      %p58 = scmp.ne.s32.totalorder %s44, %s45
      %p59 = scmp.eq.s32.totalorder %s23, 1
      %p60 = por %p58, %p59
      %p62 = scmp.ne.s32.totalorder %s45, %s61
      %p63 = scmp.eq.s32.totalorder %s23, 0
      %p64 = por %p62, %p63
      %s65 = ssub.s32 %s24, %s36
      %s66 = ssub.s32 %s25, %s32
      %s67 = sor.u32 %s65, %s66
      %p68 = scmp.eq.s32.totalorder %s67, 0
      %s70 = sadd.s32 %s69, 1
      %s71 = scalar_select %p68, %s69, %s70
      %p74 = pneg %p68
      %p75 = scmp.eq.s32.totalorder %s17, 1
      %p76 = por %p74, %p75
      %p77 = scmp.ne.s32.totalorder %s69, %s72
      %p78 = scmp.eq.s32.totalorder %s17, 0
      %p79 = por %p77, %p78
      %p80 = scmp.ne.s32.totalorder %s69, %s72
      %p81 = scmp.eq.s32.totalorder %s22, 1
      %p82 = por %p80, %p81
      %p83 = scmp.ne.s32.totalorder %s72, %s73
      %p84 = scmp.eq.s32.totalorder %s22, 0
      %p85 = por %p83, %p84
      %p86 = scmp.ne.s32.totalorder %s72, %s73
      %p87 = scmp.eq.s32.totalorder %s23, 1
      %p88 = por %p86, %p87
      %p90 = scmp.ne.s32.totalorder %s73, %s89
      %p91 = scmp.eq.s32.totalorder %s23, 0
      %p92 = por %p90, %p91
      %s93 = ssub.s32 %s24, %s36
      %p94 = scmp.eq.s32.totalorder %s93, 0
      %s96 = sadd.s32 %s95, 1
      %s97 = scalar_select %p94, %s95, %s96
      %p100 = pneg %p94
      %p101 = scmp.eq.s32.totalorder %s17, 1
      %p102 = por %p100, %p101
      %p103 = scmp.ne.s32.totalorder %s95, %s98
      %p104 = scmp.eq.s32.totalorder %s17, 0
      %p105 = por %p103, %p104
      %p106 = scmp.ne.s32.totalorder %s95, %s98
      %p107 = scmp.eq.s32.totalorder %s22, 1
      %p108 = por %p106, %p107
      %p109 = scmp.ne.s32.totalorder %s98, %s99
      %p110 = scmp.eq.s32.totalorder %s22, 0
      %p111 = por %p109, %p110
      %p112 = scmp.ne.s32.totalorder %s98, %s99
      %p113 = scmp.eq.s32.totalorder %s23, 1
      %p114 = por %p112, %p113
      %p116 = scmp.ne.s32.totalorder %s99, %s115
      %p117 = scmp.eq.s32.totalorder %s23, 0
      %p118 = por %p116, %p117
      %p119 = scmp.le.s32.totalorder 1, %s17
      %p120 = scmp.lt.s32.totalorder %s17, 3
      %p121 = pnand %p119, %p120
      %p122 = pneg %p121
      // Predicated region
      $region9: #{tpu_custom_call.1} parent=5 // pred_check
        _
      $region10: #{tpu_custom_call.1} parent=5 // pred_check_branch
        %124 = sbr.rel (%p121) target = $region12
      $region11: #{tpu_custom_call.1} parent=5 // pred_region
        %s125 = ssub.s32 %s17, 1
      $region12: #{tpu_custom_call.1} parent=5 // pred_fallthru
        _
      %p126 = scmp.lt.s32.totalorder %s17, 2
      // Predicated region
      $region13: #{tpu_custom_call.1} parent=5 // pred_check
        %p127 = pneg %p126
      $region14: #{tpu_custom_call.1} parent=5 // pred_check_branch
        %129 = sbr.rel (%p127) target = $region16
      $region15: #{tpu_custom_call.1} parent=5 // pred_region
        // Predicated region
        $region17: #{tpu_custom_call.1} parent=15 // pred_check
          %p130 = pneg %p51
        $region18: #{tpu_custom_call.1} parent=15 // pred_check_branch
          %132 = sbr.rel (%p130) target = $region20
        $region19: #{tpu_custom_call.1} parent=15 // pred_region
          %s133 = sand.u32 %s41, 1
          %s134 = scalar_lea.sflag [#allocation3], %s133
          %s135 = sand.u32 %s41, 1
          %s136 = smul.addr %s135, 8
          %s137 = scalar_lea.vmem [#allocation2], %s136
          %s138 = smul.u32 2, %s25
          %s140 = ssub.s32 128, 128
          %141 = vsyncadd %s134, %s140
          %s142 = smul.addr %s24, 2
          %s143 = sadd.s32 %s138, %s142
          %s144 = smul.addr %s143, 64
          %s145 = scalar_lea.hbm %s0, %s144
          %s147 = sshll.u32 %s137, 4
          %s148 = int_to_ptr.vmem [resolvable:$true] %s147
          %150 = dma.hbm_to_vmem [thread:$0]  %s145, 128, %s148, %s134
        $region20: #{tpu_custom_call.1} parent=15 // pred_fallthru
          _
        // Predicated region
        $region21: #{tpu_custom_call.1} parent=15 // pred_check
          %p151 = pneg %p79
        $region22: #{tpu_custom_call.1} parent=15 // pred_check_branch
          %153 = sbr.rel (%p151) target = $region24
        $region23: #{tpu_custom_call.1} parent=15 // pred_region
          %s154 = sand.u32 %s69, 1
          %s155 = scalar_lea.sflag [#allocation6], %s154
          %s156 = sand.u32 %s69, 1
          %s157 = smul.addr %s156, 2
          %s158 = scalar_lea.vmem [#allocation5], %s157
          %s159 = smul.u32 2, %s25
          %s161 = ssub.s32 32, 32
          %162 = vsyncadd %s155, %s161
          %s163 = smul.addr %s24, 2
          %s164 = sadd.s32 %s159, %s163
          %s165 = smul.addr %s164, 16
          %s166 = scalar_lea.hbm %s1, %s165
          %s168 = sshll.u32 %s158, 4
          %s169 = int_to_ptr.vmem [resolvable:$true] %s168
          %171 = dma.hbm_to_vmem [thread:$0]  %s166, 32, %s169, %s155
        $region24: #{tpu_custom_call.1} parent=15 // pred_fallthru
          _
      $region16: #{tpu_custom_call.1} parent=5 // pred_fallthru
        _
      %p172 = scmp.le.s32.totalorder 1, %s17
      %p173 = scmp.lt.s32.totalorder %s17, 3
      %p174 = pnand %p172, %p173
      %p175 = pneg %p174
      // Predicated region
      $region25: #{tpu_custom_call.1} parent=5 // pred_check
        _
      $region26: #{tpu_custom_call.1} parent=5 // pred_check_branch
        %177 = sbr.rel (%p174) target = $region28
      $region27: #{tpu_custom_call.1} parent=5 // pred_region
        %s178 = ssub.s32 %s17, 1
        %s179 = sand.u32 %s44, 1
        %s180 = scalar_lea.sflag [#allocation3], %s179
        %s181 = sand.u32 %s44, 1
        %s182 = smul.addr %s181, 8
        %s183 = scalar_lea.vmem [#allocation2], %s182
        // Predicated region
        $region29: #{tpu_custom_call.1} parent=27 // pred_check
          %p184 = pneg %p57
        $region30: #{tpu_custom_call.1} parent=27 // pred_check_branch
          %186 = sbr.rel (%p184) target = $region32
        $region31: #{tpu_custom_call.1} parent=27 // pred_region
          %187 = dma.done %s180, 128
        $region32: #{tpu_custom_call.1} parent=27 // pred_fallthru
          _
        %s188 = sand.u32 %s72, 1
        %s189 = scalar_lea.sflag [#allocation6], %s188
        %s190 = sand.u32 %s72, 1
        %s191 = smul.addr %s190, 2
        %s192 = scalar_lea.vmem [#allocation5], %s191
        // Predicated region
        $region33: #{tpu_custom_call.1} parent=27 // pred_check
          %p193 = pneg %p85
        $region34: #{tpu_custom_call.1} parent=27 // pred_check_branch
          %195 = sbr.rel (%p193) target = $region36
        $region35: #{tpu_custom_call.1} parent=27 // pred_region
          %196 = dma.done %s189, 32
        $region36: #{tpu_custom_call.1} parent=27 // pred_fallthru
          _
        %s197 = sand.u32 %s44, 1
        %s198 = scalar_lea.sflag [#allocation3], %s197
        %s199 = sand.u32 %s44, 1
        %s200 = smul.addr %s199, 8
        %s201 = scalar_lea.vmem [#allocation2], %s200
        %p202 = pneg %p57
        %p203 = pneg %p54
        %s204 = sand.u32 %s72, 1
        %s205 = scalar_lea.sflag [#allocation6], %s204
        %s206 = sand.u32 %s72, 1
        %s207 = smul.addr %s206, 2
        %s208 = scalar_lea.vmem [#allocation5], %s207
        %p209 = pneg %p85
        %p210 = pneg %p82
        %p211 = pneg %p111
        %p212 = pneg %p108
        %s213 = sand.u32 %s98, 1
        %s214 = scalar_lea.sflag [#allocation4], %s213
        %s215 = sand.u32 %s98, 1
        %s216 = smul.addr %s215, 2
        %s217 = scalar_lea.vmem [#allocation7], %s216
        %s218 = smul.u32 2, %s27
        %s219 = smul.u32 2, %s27
        %p220 = scmp.eq.s32.totalorder %s27, 0
        // Predicated region
        $region37: #{tpu_custom_call.1} parent=27 // pred_check
          %p221 = pneg %p220
        $region38: #{tpu_custom_call.1} parent=27 // pred_check_branch
          %223 = sbr.rel (%p221) target = $region40
        $region39: #{tpu_custom_call.1} parent=27 // pred_region
          %v224 = vlaneseq
          %vm225 = vcmp.ge.s32.totalorder %v224, 0
          %vm226 = vcmp.lt.s32.totalorder %v224, 256
          %vm227 = vmand %vm225, %vm226
          %228 = vst.msk [vmem:[%s217] sm:$0x3] %vm227, 0.0
        $region40: #{tpu_custom_call.1} parent=27 // pred_fallthru
          _
        %v229 = vld [vmem:[%s183] sm:$0xff]
        %v230 = vld [vmem:[%s192] sm:$0x3]
        %v232 = vcombine.high %v229, %v229
        %vm234 = vcmask 1043456
        %v235 = vsel %vm234, %v229, -inf
        %v236 = vrot.slane %v235, 4
        %v237 = vmax.f32 %v235, %v236
        %v238 = vrot.slane %v237, 2
        %v239 = vmax.f32 %v237, %v238
        %v240 = vrot.slane %v239, 1
        %v241 = vmax.f32 %v239, %v240
        %v242 = vsel %vm234, %v232, -inf
        %v243 = vrot.slane %v242, 4
        %v244 = vmax.f32 %v242, %v243
        %v245 = vrot.slane %v244, 2
        %v246 = vmax.f32 %v244, %v245
        %v247 = vrot.slane %v246, 1
        %v248 = vmax.f32 %v246, %v247
        %v251 = vcombine.low %v241, %v248
        %v253 = vsub.f32 %v229, %v251
        %v254 = vmul.f32 %v253, 1.442695
        %v255 = vpow.pop %v254
        %v257 = vcombine.high %v255, %v255
        %v259 = vsel %vm234, %v255, 0.0
        %v260 = vrot.slane %v259, 4
        %v261 = vadd.f32 %v259, %v260
        %v262 = vrot.slane %v261, 2
        %v263 = vadd.f32 %v261, %v262
        %v264 = vrot.slane %v263, 1
        %v265 = vadd.f32 %v263, %v264
        %v266 = vsel %vm234, %v257, 0.0
        %v267 = vrot.slane %v266, 4
        %v268 = vadd.f32 %v266, %v267
        %v269 = vrot.slane %v268, 2
        %v270 = vadd.f32 %v268, %v269
        %v271 = vrot.slane %v270, 1
        %v272 = vadd.f32 %v270, %v271
        %v273 = vlog2.pop %v265
        %v274 = vmul.f32 %v273, 0.6931472
        %v275 = vlog2.pop %v272
        %v276 = vmul.f32 %v275, 0.6931472
        %v277 = vadd.f32 %v241, %v274
        %v278 = vadd.f32 %v248, %v276
        %v279 = vlaneseq
        %v280 = vshrl.u32 %v279, 7
        %v281 = vlaneseq
        %v282 = vshrl.u32 %v281, 7
        %v283 = vsub.s32 0, %v282
        %v284 = vrot.slane %v230, %v283
        %v285 = vlaneseq
        %v286 = vshrl.u32 %v285, 7
        %v287 = vsub.s32 1, %v286
        %v288 = vrot.slane %v230, %v287
        %vm289 = vcmp.eq.s32.totalorder %v280, %v284
        %vm290 = vcmp.eq.s32.totalorder %v280, %v288
        %v291 = vsel %vm289, %v229, 0.0
        %v292 = vsel %vm290, %v232, 0.0
        %v293 = vsel %vm234, %v291, 0.0
        %v294 = vrot.slane %v293, 4
        %v295 = vadd.f32 %v293, %v294
        %v296 = vrot.slane %v295, 2
        %v297 = vadd.f32 %v295, %v296
        %v298 = vrot.slane %v297, 1
        %v299 = vadd.f32 %v297, %v298
        %v300 = vsel %vm234, %v292, 0.0
        %v301 = vrot.slane %v300, 4
        %v302 = vadd.f32 %v300, %v301
        %v303 = vrot.slane %v302, 2
        %v304 = vadd.f32 %v302, %v303
        %v305 = vrot.slane %v304, 1
        %v306 = vadd.f32 %v304, %v305
        %v307 = vlaneseq
        %v308 = vand.u32 %v307, 127
        %v309 = vadd.s32 %v308, 128
        %s310 = smul.u32 %s27, 256
        %v311 = vstv %s310
        %v312 = vadd.s32 %v308, %v311
        %v313 = vadd.s32 %v309, %v311
        %vm314 = vcmp.lt.s32.totalorder %v312, 256
        %vm315 = vcmp.lt.s32.totalorder %v313, 256
        %vm316 = vcmp.ne.s32.totalorder %v230, 4294967295
        %v317 = vsel %vm316, 1, 0
        %v318 = vlaneseq
        %v319 = vshrl.u32 %v318, 7
        %v320 = vsub.s32 0, %v319
        %v321 = vrot.slane %v317, %v320
        %v322 = vlaneseq
        %v323 = vshrl.u32 %v322, 7
        %v324 = vsub.s32 1, %v323
        %v325 = vrot.slane %v317, %v324
        %vm326 = vcmp.ne.s32.totalorder %v321, 0
        %vm327 = vcmp.ne.s32.totalorder %v325, 0
        %vm328 = vmand %vm314, %vm326
        %vm329 = vmand %vm315, %vm327
        %v330 = vsub.f32 %v277, %v299
        %v331 = vsub.f32 %v278, %v306
        %v332 = vsel %vm328, %v330, 0.0
        %v333 = vsel %vm329, %v331, 0.0
        %v334 = vld [vmem:[%s217] sm:$0x3]
        %v337 = vcombine.low %v332, %v333
        %v339 = vunpack.c.l.s4 1966171168
        %v340 = vunpack.c.0.s8 %v339
        %v341 = vlaneseq
        %v342 = vshrl.u32 %v341, 7
        %v343 = vsub.s32 %v340, %v342
        %v344 = vrot.slane %v337, %v343
        %v346 = vunpack.c.l.s4 1966171168
        %v347 = vunpack.c.0.s8 %v346
        %v348 = vlaneseq
        %v349 = vshrl.u32 %v348, 7
        %v350 = vsub.s32 %v347, %v349
        %v351 = vrot.slane %v344, %v350
        %v353 = vadd.f32 %v334, %v351
        %v354 = vlaneseq
        %vm355 = vcmp.ge.s32.totalorder %v354, 0
        %vm356 = vcmp.lt.s32.totalorder %v354, 256
        %vm357 = vmand %vm355, %vm356
        %358 = vst.msk [vmem:[%s217] sm:$0x3] %vm357, %v353
        %s359 = sand.u32 %s98, 1
        %s360 = scalar_lea.sflag [#allocation4], %s359
        %s361 = sand.u32 %s98, 1
        %s362 = smul.addr %s361, 2
        %s363 = scalar_lea.vmem [#allocation7], %s362
        // Predicated region
        $region41: #{tpu_custom_call.1} parent=27 // pred_check
          %p364 = pneg %p108
        $region42: #{tpu_custom_call.1} parent=27 // pred_check_branch
          %366 = sbr.rel (%p364) target = $region44
        $region43: #{tpu_custom_call.1} parent=27 // pred_region
          %s368 = ssub.s32 32, 32
          %369 = vsyncadd %s360, %s368
          %s370 = smul.addr %s26, 2
          %s371 = smul.addr %s370, 16
          %s372 = scalar_lea.hbm %s2, %s371
          %s374 = sshll.u32 %s363, 4
          %s375 = int_to_ptr.vmem [resolvable:$true] %s374
          %377 = dma.vmem_to_hbm [thread:$0]  %s375, 32, %s372, %s360
        $region44: #{tpu_custom_call.1} parent=27 // pred_fallthru
          _
      $region28: #{tpu_custom_call.1} parent=5 // pred_fallthru
        _
      %p378 = scmp.le.s32.totalorder 2, %s17
      // Predicated region
      $region45: #{tpu_custom_call.1} parent=5 // pred_check
        %p379 = pneg %p378
      $region46: #{tpu_custom_call.1} parent=5 // pred_check_branch
        %381 = sbr.rel (%p379) target = $region48
      $region47: #{tpu_custom_call.1} parent=5 // pred_region
        %s382 = ssub.s32 %s17, 2
        // Predicated region
        $region49: #{tpu_custom_call.1} parent=47 // pred_check
          %p383 = pneg %p114
        $region50: #{tpu_custom_call.1} parent=47 // pred_check_branch
          %385 = sbr.rel (%p383) target = $region52
        $region51: #{tpu_custom_call.1} parent=47 // pred_region
          %s386 = sand.u32 %s99, 1
          %s387 = scalar_lea.sflag [#allocation4], %s386
          %s388 = sand.u32 %s99, 1
          %s389 = smul.addr %s388, 2
          %s390 = scalar_lea.vmem [#allocation7], %s389
          %391 = dma.done %s387, 32
        $region52: #{tpu_custom_call.1} parent=47 // pred_fallthru
          _
      $region48: #{tpu_custom_call.1} parent=5 // pred_fallthru
        _
    $region6: #{tpu_custom_call.1} parent=1 // loop_footer
      %s21 = sadd.s32 1, %s17
    $region7: #{tpu_custom_call.1} parent=1 // loop_footer_branch
      %16 = sbr.rel target = $region3
    $region8: #{tpu_custom_call.1} parent=1 // loop_exit
      _
    %392 = vsyncpa [#allocation3], 1
    %s393 = scalar_lea.sflag [#allocation3], 1
    %394 = vsyncpa %s393, 1
    %395 = vsyncpa [#allocation6], 1
    %s396 = scalar_lea.sflag [#allocation6], 1
    %397 = vsyncpa %s396, 1
    %398 = vsyncpa [#allocation4], 1
    %s399 = scalar_lea.sflag [#allocation4], 1
    %400 = vsyncpa %s399, 1

</llo_original>
